<compile_context>
chip_gen: v5e
topology: v5e:2x2
jax: 0.10.0
libtpu: 0.0.40
codegen_flags: <defaults>
</compile_context>

<pallas_src>
import numpy as np
import jax
import jax.numpy as jnp
from jax.experimental import pallas as pl
from jax.experimental.pallas import tpu as pltpu

_MiB = 1024 * 1024


def _vmem_capacity_bytes():
    """Physical VMEM per core; conservative (v7x-sized) fallback if the query fails."""
    try:
        return int(pltpu.get_tpu_info().vmem_capacity_bytes)
    except Exception:
        return 64 * _MiB


def _sublane_tile(itemsize):
    return 32 // itemsize  # 8 for f32, 16 for bf16, 32 for int8


def _pick_chunk(W):
    """Column-chunk width: full width for small W, else largest even divisor <= 128."""
    if W <= 128:
        return W
    return max(d for d in range(2, 129, 2) if W % d == 0)


def _haar_matrix(wc, dtype):
    """Fused vertical+horizontal Haar analysis taps for one column chunk.

    Shape (2, wc, 2*wc): index 0 multiplies the even (top) image row of the pair, index 1
    the odd (bottom) row. Output columns are ordered [LL | LH | HL | HH] (pywt cA, cH, cV,
    cD signs), each wc//2 wide, with +/-0.5 entries (scale folded in; exact in bf16/f32).
    """
    whc = wc // 2
    r = np.arange(2 * wc)
    c = np.arange(2 * wc)
    bot = r >= wc                    # taps for the odd image row
    rc = r % wc                      # input column within the chunk
    odd = (rc % 2) == 1              # odd input column
    j = rc // 2                      # output column this input column contributes to
    s = c // whc                     # subband index of the output column
    cj = c % whc                     # output column within the subband
    hit = j[:, None] == cj[None, :]
    sgn = np.ones((2 * wc, 4))
    sgn[:, 1] = np.where(bot, -1.0, 1.0)            # LH = cH: vertical detail
    sgn[:, 2] = np.where(odd, -1.0, 1.0)            # HL = cV: horizontal detail
    sgn[:, 3] = sgn[:, 1] * sgn[:, 2]               # HH = cD: diagonal detail
    m = np.where(hit, 0.5 * sgn[:, s], 0.0).reshape(2, wc, 2 * wc)
    return jnp.asarray(m, dtype=dtype)


def _pick_blocks(N, C, hh, W, itemsize, budget_bytes, sub):
    """Choose (batch, channel, row) block sizes.

    Per-step footprint counts the double-buffered input+output blocks in x.dtype plus the
    f32 matmul results / per-subband assembly / downcast temporaries (~2*itemsize + 8
    extra bytes per element). Prefers >= 2 grid steps so megacore (v7x) can split work.
    """
    bytes_per_row = 2 * W * (6 * itemsize + 8)   # one vertical row-pair, all temps counted
    per_img = hh * bytes_per_row
    max_imgs = max(1, int(budget_bytes) // per_img)

    if hh % sub != 0:
        # Leading-dim merge reshape is only guaranteed layout-free with trivial leading
        # dims when hh is not a multiple of the sublane tile.
        bn = bc = 1
    else:
        bc = max(d for d in range(1, C + 1) if C % d == 0 and d <= max_imgs)
        cand = [d for d in range(1, N + 1) if N % d == 0 and d * bc <= max_imgs]
        pref = [d for d in cand if (N // d) * (C // bc) >= 2]
        bn = max(pref) if pref else max(cand)

    bh = hh
    over_budget = bn * bc * hh * bytes_per_row > budget_bytes
    single_step = (N // bn) * (C // bc) < 2
    if over_budget or single_step:
        # Split rows (sublane-tile aligned) to fit VMEM and/or expose >= 2 parallel steps.
        divs = [d for d in range(1, hh) if hh % d == 0 and d % sub == 0]
        fitting = [d for d in divs if bn * bc * d * bytes_per_row <= budget_bytes]
        if fitting:
            bh = max(fitting)
        elif divs:
            bh = min(divs)
    return bn, bc, bh


def wavelet_transform(x, *, vmem_budget_bytes=None, vmem_limit_bytes=None):
    """Equivalent of WaveletTransform('haar').forward for NCHW input with even H, W.

    Returns (N, 4, C, H//2, W//2) = stack([LL, LH, HL, HH], axis=1) with pywt subband
    order and signs (cA, cH, cV, cD).
    """
    N, C, H, W = x.shape
    assert H % 2 == 0 and W % 2 == 0, "Haar DWT kernel assumes even spatial dims"
    hh, wh = H // 2, W // 2
    itemsize = jnp.dtype(x.dtype).itemsize
    sub = _sublane_tile(itemsize)

    cap = _vmem_capacity_bytes()
    if vmem_budget_bytes is None:
        vmem_budget_bytes = cap // 2          # ~64 MiB on v5e/v6e, ~32 MiB on v7x
    if vmem_limit_bytes is None:
        vmem_limit_bytes = (3 * cap) // 4     # ~96 MiB on v5e/v6e, ~48 MiB on v7x

    wc = _pick_chunk(W)
    whc = wc // 2
    nchunks = W // wc

    cmat = _haar_matrix(wc, x.dtype)
    # Reserve budget for the (double-buffered) VMEM-resident analysis matrix.
    budget = max(_MiB, int(vmem_budget_bytes) - 2 * cmat.size * itemsize)

    bn, bc, bh = _pick_blocks(N, C, hh, W, itemsize, budget, sub)
    nr = hh // bh
    m_rows = bn * bc * bh

    # Free HBM reshape: vertical pixel pairs become lane-adjacent halves [0:W) / [W:2W).
    xf = x.reshape(N, C, hh, 2 * W)

    def kernel(c_ref, x_ref, o_ref):
        ct = c_ref[0]                              # (wc, 2*wc) taps for even (top) rows
        cb = c_ref[1]                              # (wc, 2*wc) taps for odd (bottom) rows
        z = x_ref[...].reshape(m_rows, 2 * W)      # layout-free merge of leading dims

        parts = []
        for q in range(nchunks):
            top = z[:, q * wc:(q + 1) * wc]
            bot = z[:, W + q * wc:W + (q + 1) * wc]
            # Fused vertical+horizontal Haar: one f32-accumulated MXU matmul per parity.
            parts.append(jnp.dot(top, ct, preferred_element_type=jnp.float32)
                         + jnp.dot(bot, cb, preferred_element_type=jnp.float32))

        dt = o_ref.dtype
        for s in range(4):                         # pywt order: LL, LH(cH), HL(cV), HH(cD)
            if nchunks == 1:
                band = parts[0][:, s * whc:(s + 1) * whc]
            else:
                band = jnp.concatenate(
                    [p[:, s * whc:(s + 1) * whc] for p in parts], axis=-1)
            o_ref[:, s, :, :, :] = band.reshape(bn, bc, bh, wh).astype(dt)

    return pl.pallas_call(
        kernel,
        out_shape=jax.ShapeDtypeStruct((N, 4, C, hh, wh), x.dtype),
        grid=(N // bn, C // bc, nr),
        in_specs=[
            # Constant index_map -> the analysis matrix stays VMEM-resident (no re-DMA).
            pl.BlockSpec((2, wc, 2 * wc), lambda i, j, r: (0, 0, 0)),
            pl.BlockSpec((bn, bc, bh, 2 * W), lambda i, j, r: (i, j, r, 0)),
        ],
        out_specs=pl.BlockSpec((bn, 4, bc, bh, wh), lambda i, j, r: (i, 0, j, r, 0)),
        compiler_params=pltpu.CompilerParams(
            dimension_semantics=("parallel", "parallel", "parallel"),
            vmem_limit_bytes=int(vmem_limit_bytes),
        ),
    )(cmat, xf)


def _reference(x):
    """Pure-JAX reference of pywt.dwt2('haar') + stack, for correctness check."""
    x00 = x[:, :, 0::2, 0::2]
    x01 = x[:, :, 0::2, 1::2]
    x10 = x[:, :, 1::2, 0::2]
    x11 = x[:, :, 1::2, 1::2]
    ll = (x00 + x01 + x10 + x11) * 0.5
    lh = (x00 + x01 - x10 - x11) * 0.5   # cH ('da')
    hl = (x00 - x01 + x10 - x11) * 0.5   # cV ('ad')
    hh = (x00 - x01 - x10 + x11) * 0.5   # cD ('dd')
    return jnp.stack([ll, lh, hl, hh], axis=1)


if __name__ == "__main__":
    key = jax.random.PRNGKey(0)
    N, C, H, W = 2, 4, 16, 16
    x = jax.random.normal(key, (N, C, H, W), dtype=jnp.float32)

    y = jax.block_until_ready(wavelet_transform(x))

    assert y.shape == (N, 4, C, H // 2, W // 2), y.shape
    assert y.dtype == x.dtype, y.dtype

    y_ref = jax.block_until_ready(_reference(x))
    np.testing.assert_allclose(np.asarray(y), np.asarray(y_ref), rtol=1e-5, atol=1e-5)

    print("KERNEL_OK")
</pallas_src>

<mosaic_0001>
module attributes {stable_mosaic.version = 11 : i64} {
  func.func @kernel(%arg0: i32, %arg1: i32, %arg2: i32, %arg3: memref<2x16x32xf32, #tpu.memory_space<vmem>>, %arg4: memref<1x4x8x32xf32, #tpu.memory_space<vmem>>, %arg5: memref<1x4x4x8x8xf32, #tpu.memory_space<vmem>>) attributes {dimension_semantics = [#tpu.dimension_semantics<parallel>, #tpu.dimension_semantics<parallel>, #tpu.dimension_semantics<parallel>], iteration_bounds = array<i64: 2, 1, 1>, scalar_prefetch = 0 : i64, scratch_operands = 0 : i64, tpu.core_type = #tpu.core_type<tc>, window_params = [{pipeline_mode = #tpu.pipeline_mode<synchronous>, transform_indices = @transform_0, window_bounds = array<i64: 2, 16, 32>}, {transform_indices = @transform_1, window_bounds = array<i64: 1, 4, 8, 32>}, {transform_indices = @transform_2, window_bounds = array<i64: 1, 4, 4, 8, 8>}]} {
    %c0 = arith.constant 0 : index
    %c0_0 = arith.constant 0 : index
    %c0_1 = arith.constant 0 : index
    %0 = vector.load %arg3[%c0, %c0_0, %c0_1] : memref<2x16x32xf32, #tpu.memory_space<vmem>>, vector<1x16x32xf32>
    %1 = vector.shape_cast %0 : vector<1x16x32xf32> to vector<16x32xf32>
    %c1 = arith.constant 1 : index
    %c0_2 = arith.constant 0 : index
    %c0_3 = arith.constant 0 : index
    %2 = vector.load %arg3[%c1, %c0_2, %c0_3] : memref<2x16x32xf32, #tpu.memory_space<vmem>>, vector<1x16x32xf32>
    %3 = vector.shape_cast %2 : vector<1x16x32xf32> to vector<16x32xf32>
    %c0_4 = arith.constant 0 : index
    %c0_5 = arith.constant 0 : index
    %c0_6 = arith.constant 0 : index
    %c0_7 = arith.constant 0 : index
    %4 = vector.load %arg4[%c0_4, %c0_5, %c0_6, %c0_7] : memref<1x4x8x32xf32, #tpu.memory_space<vmem>>, vector<1x4x8x32xf32>
    %5 = vector.shape_cast %4 : vector<1x4x8x32xf32> to vector<32x32xf32>
    %6 = vector.extract_strided_slice %5 {offsets = [0, 0], sizes = [32, 16], strides = [1, 1]} : vector<32x32xf32> to vector<32x16xf32>
    %7 = vector.extract_strided_slice %5 {offsets = [0, 16], sizes = [32, 16], strides = [1, 1]} : vector<32x32xf32> to vector<32x16xf32>
    %cst = arith.constant dense<0.000000e+00> : vector<32x32xf32>
    %8 = tpu.matmul %6, %1, %cst {dimension_numbers = #tpu.dot_dimension_numbers<[1], [0], [0], [1], [0, 0, 1, 1], [], []>} : vector<32x16xf32>, vector<16x32xf32>, vector<32x32xf32> -> vector<32x32xf32>
    %cst_8 = arith.constant dense<0.000000e+00> : vector<32x32xf32>
    %9 = tpu.matmul %7, %3, %cst_8 {dimension_numbers = #tpu.dot_dimension_numbers<[1], [0], [0], [1], [0, 0, 1, 1], [], []>} : vector<32x16xf32>, vector<16x32xf32>, vector<32x32xf32> -> vector<32x32xf32>
    %10 = arith.addf %8, %9 : vector<32x32xf32>
    %11 = vector.extract_strided_slice %10 {offsets = [0, 0], sizes = [32, 8], strides = [1, 1]} : vector<32x32xf32> to vector<32x8xf32>
    %12 = vector.shape_cast %11 : vector<32x8xf32> to vector<1x4x8x8xf32>
    %c0_9 = arith.constant 0 : index
    %c0_10 = arith.constant 0 : index
    %c0_11 = arith.constant 0 : index
    %c0_12 = arith.constant 0 : index
    %c0_13 = arith.constant 0 : index
    %13 = vector.load %arg5[%c0_9, %c0_10, %c0_11, %c0_12, %c0_13] : memref<1x4x4x8x8xf32, #tpu.memory_space<vmem>>, vector<1x1x4x8x8xf32>
    %14 = vector.shape_cast %13 : vector<1x1x4x8x8xf32> to vector<1x4x8x8xf32>
    %15 = vector.shape_cast %12 : vector<1x4x8x8xf32> to vector<1x1x4x8x8xf32>
    tpu.vector_store %arg5[%c0_9, %c0_10, %c0_11, %c0_12, %c0_13], %15 {strides = array<i32>} : memref<1x4x4x8x8xf32, #tpu.memory_space<vmem>>, vector<1x1x4x8x8xf32>,
    %16 = vector.extract_strided_slice %10 {offsets = [0, 8], sizes = [32, 8], strides = [1, 1]} : vector<32x32xf32> to vector<32x8xf32>
    %17 = vector.shape_cast %16 : vector<32x8xf32> to vector<1x4x8x8xf32>
    %c0_14 = arith.constant 0 : index
    %c1_15 = arith.constant 1 : index
    %c0_16 = arith.constant 0 : index
    %c0_17 = arith.constant 0 : index
    %c0_18 = arith.constant 0 : index
    %18 = vector.load %arg5[%c0_14, %c1_15, %c0_16, %c0_17, %c0_18] : memref<1x4x4x8x8xf32, #tpu.memory_space<vmem>>, vector<1x1x4x8x8xf32>
    %19 = vector.shape_cast %18 : vector<1x1x4x8x8xf32> to vector<1x4x8x8xf32>
    %20 = vector.shape_cast %17 : vector<1x4x8x8xf32> to vector<1x1x4x8x8xf32>
    tpu.vector_store %arg5[%c0_14, %c1_15, %c0_16, %c0_17, %c0_18], %20 {strides = array<i32>} : memref<1x4x4x8x8xf32, #tpu.memory_space<vmem>>, vector<1x1x4x8x8xf32>,
    %21 = vector.extract_strided_slice %10 {offsets = [0, 16], sizes = [32, 8], strides = [1, 1]} : vector<32x32xf32> to vector<32x8xf32>
    %22 = vector.shape_cast %21 : vector<32x8xf32> to vector<1x4x8x8xf32>
    %c0_19 = arith.constant 0 : index
    %c2 = arith.constant 2 : index
    %c0_20 = arith.constant 0 : index
    %c0_21 = arith.constant 0 : index
    %c0_22 = arith.constant 0 : index
    %23 = vector.load %arg5[%c0_19, %c2, %c0_20, %c0_21, %c0_22] : memref<1x4x4x8x8xf32, #tpu.memory_space<vmem>>, vector<1x1x4x8x8xf32>
    %24 = vector.shape_cast %23 : vector<1x1x4x8x8xf32> to vector<1x4x8x8xf32>
    %25 = vector.shape_cast %22 : vector<1x4x8x8xf32> to vector<1x1x4x8x8xf32>
    tpu.vector_store %arg5[%c0_19, %c2, %c0_20, %c0_21, %c0_22], %25 {strides = array<i32>} : memref<1x4x4x8x8xf32, #tpu.memory_space<vmem>>, vector<1x1x4x8x8xf32>,
    %26 = vector.extract_strided_slice %10 {offsets = [0, 24], sizes = [32, 8], strides = [1, 1]} : vector<32x32xf32> to vector<32x8xf32>
    %27 = vector.shape_cast %26 : vector<32x8xf32> to vector<1x4x8x8xf32>
    %c0_23 = arith.constant 0 : index
    %c3 = arith.constant 3 : index
    %c0_24 = arith.constant 0 : index
    %c0_25 = arith.constant 0 : index
    %c0_26 = arith.constant 0 : index
    %28 = vector.load %arg5[%c0_23, %c3, %c0_24, %c0_25, %c0_26] : memref<1x4x4x8x8xf32, #tpu.memory_space<vmem>>, vector<1x1x4x8x8xf32>
    %29 = vector.shape_cast %28 : vector<1x1x4x8x8xf32> to vector<1x4x8x8xf32>
    %30 = vector.shape_cast %27 : vector<1x4x8x8xf32> to vector<1x1x4x8x8xf32>
    tpu.vector_store %arg5[%c0_23, %c3, %c0_24, %c0_25, %c0_26], %30 {strides = array<i32>} : memref<1x4x4x8x8xf32, #tpu.memory_space<vmem>>, vector<1x1x4x8x8xf32>,
    return
  }
  func.func @transform_0(%arg0: i32, %arg1: i32, %arg2: i32) -> (i32, i32, i32) {
    %c0_i32 = arith.constant 0 : i32
    %c0_i32_0 = arith.constant 0 : i32
    %c0_i32_1 = arith.constant 0 : i32
    %c0_i32_2 = arith.constant 0 : i32
    return %c0_i32, %c0_i32_0, %c0_i32_1 : i32, i32, i32
  }
  func.func @transform_1(%arg0: i32, %arg1: i32, %arg2: i32) -> (i32, i32, i32, i32) {
    %c0_i32 = arith.constant 0 : i32
    %c0_i32_0 = arith.constant 0 : i32
    return %arg0, %arg1, %arg2, %c0_i32 : i32, i32, i32, i32
  }
  func.func @transform_2(%arg0: i32, %arg1: i32, %arg2: i32) -> (i32, i32, i32, i32, i32) {
    %c0_i32 = arith.constant 0 : i32
    %c0_i32_0 = arith.constant 0 : i32
    %c0_i32_1 = arith.constant 0 : i32
    return %arg0, %c0_i32, %arg1, %arg2, %c0_i32_0 : i32, i32, i32, i32, i32
  }
}

</mosaic_0001>

<llo_original>
// kernel: tpu_custom_call.1
$region0: #{tpu_custom_call.1}
  #allocation0 [shape = 'u32[]', space=smem, size = 0x4, offset = 0x4, fixed_abs, tag = 'smem constant byte address 0x4 - core index']
  #allocation1 [shape = 'u32[72,128]{1,0:T(1,128)}', space=vmem, size = 0x9000, scoped, tag = 'internal scratch']
  %s0 = inlined_call_operand.hbm [shape: f32[2,16,32], index: 0, kind: input, shape index: {}]
  %s1 = inlined_call_operand.hbm [shape: f32[2,4,8,32], index: 1, kind: input, shape index: {}]
  %s2 = inlined_call_operand.hbm [shape: f32[2,4,4,8,8], index: 2, kind: output, shape index: {}]
  %s3 = sld [smem:[#allocation0]]
  $region49: #{tpu_custom_call.1} parent=0
    _
  %s5 = ssub.s32 1, %s3
  %s6 = scalar_select 0, %s5, %s3
  $region1: #{tpu_custom_call.1} parent=0
    #allocation2 [shape = 'u8[16384]{0}', space=vmem, size = 0x4000, scoped, tag = 'input window, operand 0, single buffered']
    #allocation3 [shape = 's32[2]{0}', space=sflag, size = 0x8, scoped, tag = 'scoped memory for tpu_custom_call.1']
    #allocation4 [shape = 's32[2]{0}', space=sflag, size = 0x8, scoped, tag = 'scoped memory for tpu_custom_call.1']
    #allocation5 [shape = 'u8[32768]{0}', space=vmem, size = 0x8000, scoped, tag = 'input window, operand 1']
    #allocation6 [shape = 's32[2]{0}', space=sflag, size = 0x8, scoped, tag = 'scoped memory for tpu_custom_call.1']
    #allocation7 [shape = 'u8[131072]{0}', space=vmem, size = 0x20000, scoped, tag = 'output window, operand 0']
    %7 = vsyncpa [#allocation3], 0
    %8 = vsyncpa [#allocation6], 0
    %s9 = scalar_lea.sflag [#allocation6], 1
    %10 = vsyncpa %s9, 0
    %11 = vsyncpa [#allocation4], 0
    %s12 = scalar_lea.sflag [#allocation4], 1
    %13 = vsyncpa %s12, 0
    loop: start=0, step=1, limit=4
    $region2: #{tpu_custom_call.1} parent=1 // loop_pre_header
      _
    $region3: #{tpu_custom_call.1} parent=1 // loop_header
      %s15 = sphi 0, %s19
      %p16 = scmp.ge.s32.totalorder %s15, 4
      %s22 = sphi 0, %s41
      %s23 = sphi 0, %s37
      %s24 = sphi 0, %s33
      %s25 = sphi 0, %s22
      %s26 = sphi 0, %s23
      %s27 = sphi 0, %s24
      %s28 = sphi 0, %s25
      %s29 = sphi 0, %s26
      %s30 = sphi 0, %s27
      %s42 = sphi 0, %s42
      %s44 = sphi 0, %s42
      %s45 = sphi 0, %s44
      %s59 = sphi 0, %s45
      %s69 = sphi 0, %s71
      %s72 = sphi 0, %s69
      %s73 = sphi 0, %s72
      %s89 = sphi 0, %s73
      %s99 = sphi 0, %s101
      %s102 = sphi 0, %s99
      %s103 = sphi 0, %s102
      %s119 = sphi 0, %s103
    $region4: #{tpu_custom_call.1} parent=1 // loop_header_branch
      %18 = sbr.rel (%p16) target = $region8
    $region5: #{tpu_custom_call.1} parent=1 // loop_body
      %s20 = ssub.s32 %s15, 1
      %s21 = ssub.s32 %s15, 2
      %s31 = sadd.s32 1, %s24
      %p32 = scmp.ge.s32.totalorder %s31, 1
      %s33 = scalar_select %p32, 0, %s31
      %s34 = sadd.s32 1, %s23
      %s35 = scalar_select %p32, %s34, %s23
      %p36 = scmp.ge.s32.totalorder %s35, 1
      %s37 = scalar_select %p36, 0, %s35
      %s38 = sadd.s32 1, %s22
      %s39 = scalar_select %p36, %s38, %s22
      %p40 = scmp.ge.s32.totalorder %s39, 2
      %s41 = scalar_select %p40, 0, %s39
      %s43 = sadd.s32 %s42, 1
      %p46 = scmp.eq.s32.totalorder %s15, 1
      %p47 = scmp.ne.s32.totalorder %s42, %s44
      %p48 = scmp.eq.s32.totalorder %s15, 0
      %p49 = por %p47, %p48
      %p50 = scmp.ne.s32.totalorder %s42, %s44
      %p51 = scmp.eq.s32.totalorder %s20, 1
      %p52 = por %p50, %p51
      %p53 = scmp.ne.s32.totalorder %s44, %s45
      %p54 = scmp.eq.s32.totalorder %s20, 0
      %p55 = por %p53, %p54
      %p56 = scmp.ne.s32.totalorder %s44, %s45
      %p57 = scmp.eq.s32.totalorder %s21, 1
      %p58 = por %p56, %p57
      %p60 = scmp.ne.s32.totalorder %s45, %s59
      %p61 = scmp.eq.s32.totalorder %s21, 0
      %p62 = por %p60, %p61
      %s63 = ssub.s32 %s22, %s41
      %s64 = ssub.s32 %s23, %s37
      %s65 = sor.u32 %s63, %s64
      %s66 = ssub.s32 %s24, %s33
      %s67 = sor.u32 %s65, %s66
      %p68 = scmp.eq.s32.totalorder %s67, 0
      %s70 = sadd.s32 %s69, 1
      %s71 = scalar_select %p68, %s69, %s70
      %p74 = pneg %p68
      %p75 = scmp.eq.s32.totalorder %s15, 1
      %p76 = por %p74, %p75
      %p77 = scmp.ne.s32.totalorder %s69, %s72
      %p78 = scmp.eq.s32.totalorder %s15, 0
      %p79 = por %p77, %p78
      %p80 = scmp.ne.s32.totalorder %s69, %s72
      %p81 = scmp.eq.s32.totalorder %s20, 1
      %p82 = por %p80, %p81
      %p83 = scmp.ne.s32.totalorder %s72, %s73
      %p84 = scmp.eq.s32.totalorder %s20, 0
      %p85 = por %p83, %p84
      %p86 = scmp.ne.s32.totalorder %s72, %s73
      %p87 = scmp.eq.s32.totalorder %s21, 1
      %p88 = por %p86, %p87
      %p90 = scmp.ne.s32.totalorder %s73, %s89
      %p91 = scmp.eq.s32.totalorder %s21, 0
      %p92 = por %p90, %p91
      %s93 = ssub.s32 %s22, %s41
      %s94 = ssub.s32 %s23, %s37
      %s95 = sor.u32 %s93, %s94
      %s96 = ssub.s32 %s24, %s33
      %s97 = sor.u32 %s95, %s96
      %p98 = scmp.eq.s32.totalorder %s97, 0
      %s100 = sadd.s32 %s99, 1
      %s101 = scalar_select %p98, %s99, %s100
      %p104 = pneg %p98
      %p105 = scmp.eq.s32.totalorder %s15, 1
      %p106 = por %p104, %p105
      %p107 = scmp.ne.s32.totalorder %s99, %s102
      %p108 = scmp.eq.s32.totalorder %s15, 0
      %p109 = por %p107, %p108
      %p110 = scmp.ne.s32.totalorder %s99, %s102
      %p111 = scmp.eq.s32.totalorder %s20, 1
      %p112 = por %p110, %p111
      %p113 = scmp.ne.s32.totalorder %s102, %s103
      %p114 = scmp.eq.s32.totalorder %s20, 0
      %p115 = por %p113, %p114
      %p116 = scmp.ne.s32.totalorder %s102, %s103
      %p117 = scmp.eq.s32.totalorder %s21, 1
      %p118 = por %p116, %p117
      %p120 = scmp.ne.s32.totalorder %s103, %s119
      %p121 = scmp.eq.s32.totalorder %s21, 0
      %p122 = por %p120, %p121
      %p123 = scmp.le.s32.totalorder 1, %s15
      %p124 = scmp.lt.s32.totalorder %s15, 3
      %p125 = pnand %p123, %p124
      %p126 = pneg %p125
      // Predicated region
      $region9: #{tpu_custom_call.1} parent=5 // pred_check
        _
      $region10: #{tpu_custom_call.1} parent=5 // pred_check_branch
        %128 = sbr.rel (%p125) target = $region12
      $region11: #{tpu_custom_call.1} parent=5 // pred_region
        %s129 = ssub.s32 %s15, 1
        // Predicated region
        $region13: #{tpu_custom_call.1} parent=11 // pred_check
          %p130 = pneg %p55
        $region14: #{tpu_custom_call.1} parent=11 // pred_check_branch
          %132 = sbr.rel (%p130) target = $region16
        $region15: #{tpu_custom_call.1} parent=11 // pred_region
          %134 = vsyncadd [#allocation3], 0
          %s135 = sshll.u32 %s0, 4
          %s136 = int_to_ptr.hbm [resolvable:$true] %s135
          %s137 = sshll.u32 [#allocation2], 4
          %s138 = int_to_ptr.vmem [resolvable:$true] %s137
          %143 = dma.hbm_to_vmem [thread:$0]  %s136, 512, %s138, [#allocation3], 128, 128, 8
        $region16: #{tpu_custom_call.1} parent=11 // pred_fallthru
          _
      $region12: #{tpu_custom_call.1} parent=5 // pred_fallthru
        _
      %p144 = scmp.lt.s32.totalorder %s15, 2
      // Predicated region
      $region17: #{tpu_custom_call.1} parent=5 // pred_check
        %p145 = pneg %p144
      $region18: #{tpu_custom_call.1} parent=5 // pred_check_branch
        %147 = sbr.rel (%p145) target = $region20
      $region19: #{tpu_custom_call.1} parent=5 // pred_region
        // Predicated region
        $region21: #{tpu_custom_call.1} parent=19 // pred_check
          %p148 = pneg %p79
        $region22: #{tpu_custom_call.1} parent=19 // pred_check_branch
          %150 = sbr.rel (%p148) target = $region24
        $region23: #{tpu_custom_call.1} parent=19 // pred_region
          %s151 = sand.u32 %s69, 1
          %s152 = scalar_lea.sflag [#allocation6], %s151
          %s153 = sand.u32 %s69, 1
          %s154 = smul.addr %s153, 32
          %s155 = scalar_lea.vmem [#allocation5], %s154
          %s156 = smul.u32 4, %s23
          %158 = vsyncadd %s152, 0
          %s159 = sadd.s32 %s24, %s156
          %s160 = smul.addr %s22, 4
          %s161 = sadd.s32 %s159, %s160
          %s162 = smul.addr %s161, 8
          %s163 = scalar_lea.hbm %s1, %s162
          %s164 = sshll.u32 %s163, 4
          %s165 = int_to_ptr.hbm [resolvable:$true] %s164
          %s166 = sshll.u32 %s155, 4
          %s167 = int_to_ptr.vmem [resolvable:$true] %s166
          %172 = dma.hbm_to_vmem [thread:$0]  %s165, 512, %s167, %s152, 128, 128, 8
        $region24: #{tpu_custom_call.1} parent=19 // pred_fallthru
          _
      $region20: #{tpu_custom_call.1} parent=5 // pred_fallthru
        _
      %p173 = scmp.le.s32.totalorder 1, %s15
      %p174 = scmp.lt.s32.totalorder %s15, 3
      %p175 = pnand %p173, %p174
      %p176 = pneg %p175
      // Predicated region
      $region25: #{tpu_custom_call.1} parent=5 // pred_check
        _
      $region26: #{tpu_custom_call.1} parent=5 // pred_check_branch
        %178 = sbr.rel (%p175) target = $region28
      $region27: #{tpu_custom_call.1} parent=5 // pred_region
        %s179 = ssub.s32 %s15, 1
        // Predicated region
        $region29: #{tpu_custom_call.1} parent=27 // pred_check
          %p180 = pneg %p55
        $region30: #{tpu_custom_call.1} parent=27 // pred_check_branch
          %182 = sbr.rel (%p180) target = $region32
        $region31: #{tpu_custom_call.1} parent=27 // pred_region
          %184 = dma.done [#allocation3], 512
        $region32: #{tpu_custom_call.1} parent=27 // pred_fallthru
          _
        %s185 = sand.u32 %s72, 1
        %s186 = scalar_lea.sflag [#allocation6], %s185
        %s187 = sand.u32 %s72, 1
        %s188 = smul.addr %s187, 32
        %s189 = scalar_lea.vmem [#allocation5], %s188
        // Predicated region
        $region33: #{tpu_custom_call.1} parent=27 // pred_check
          %p190 = pneg %p85
        $region34: #{tpu_custom_call.1} parent=27 // pred_check_branch
          %192 = sbr.rel (%p190) target = $region36
        $region35: #{tpu_custom_call.1} parent=27 // pred_region
          %194 = dma.done %s186, 512
        $region36: #{tpu_custom_call.1} parent=27 // pred_fallthru
          _
        %p195 = pneg %p55
        %p196 = pneg %p52
        %s197 = sand.u32 %s72, 1
        %s198 = scalar_lea.sflag [#allocation6], %s197
        %s199 = sand.u32 %s72, 1
        %s200 = smul.addr %s199, 32
        %s201 = scalar_lea.vmem [#allocation5], %s200
        %p202 = pneg %p85
        %p203 = pneg %p82
        %p204 = pneg %p115
        %p205 = pneg %p112
        %s206 = sand.u32 %s102, 1
        %s207 = scalar_lea.sflag [#allocation4], %s206
        %s208 = sand.u32 %s102, 1
        %s209 = smul.addr %s208, 128
        %s210 = scalar_lea.vmem [#allocation7], %s209
        %s211 = smul.u32 4, %s26
        %s212 = smul.u32 4, %s26
        %v213 = vld [vmem:[#allocation2] sm:$0xff]
        %v214 = vld [vmem:[#allocation2 + $0x8] sm:$0xff]
        %s215 = scalar_lea.vmem [#allocation2], 16
        %v216 = vld [vmem:[%s215] sm:$0xff]
        %v217 = vld [vmem:[%s215 + $0x8] sm:$0xff]
        %v218 = vld [vmem:[%s189] sm:$0xff]
        %v219 = vld [vmem:[%s189 + $0x8] sm:$0xff]
        %v220 = vld [vmem:[%s189 + $0x10] sm:$0xff]
        %v221 = vld [vmem:[%s189 + $0x18] sm:$0xff]
        %226 = vrot.lane.b32.xlu0 %v218, 112
        %v227 = vpop.permute.xlu0 %226
        %228 = vrot.lane.b32.xlu0 %v219, 112
        %v229 = vpop.permute.xlu0 %228
        %230 = vrot.lane.b32.xlu0 %v220, 112
        %v231 = vpop.permute.xlu0 %230
        %232 = vrot.lane.b32.xlu0 %v221, 112
        %v233 = vpop.permute.xlu0 %232
        %vm234 = vcmask 130048
        %v235 = vsel %vm234, %v227, 0
        %v237 = vsel %vm234, %v229, 0
        %v239 = vsel %vm234, %v231, 0
        %v241 = vsel %vm234, %v233, 0
        %243 = vmatpush.msra.mxu0 0.0
        %244 = vmatpush.msra.mxu0 0.0
        %245 = vmatpush.msra.mxu0 0.0
        %246 = vmatpush.msra.mxu0 0.0
        %247 = vmatpush.msra.mxu0 0.0
        %248 = vmatpush.msra.mxu0 0.0
        %249 = vmatpush.msra.mxu0 0.0
        %250 = vmatpush.msra.mxu0 0.0
        %251 = vmatpush.msra.mxu0 0.0
        %252 = vmatpush.msra.mxu0 0.0
        %253 = vmatpush.msra.mxu0 0.0
        %254 = vmatpush.msra.mxu0 0.0
        %255 = vmatpush.msra.mxu0 0.0
        %256 = vmatpush.msra.mxu0 0.0
        %257 = vmatpush.msra.mxu0 %v217
        %258 = vmatpush.msra.mxu0 %v216
        %259 = vmatmul.f32.gmra.mxu0 %v235
        %v260 = vpop.f32.mrf.mxu0
        %v261 = vadd.f32 0.0, %v260
        %262 = vmatmul.f32.gmra.mxu0 %v237
        %v263 = vpop.f32.mrf.mxu0
        %v264 = vadd.f32 0.0, %v263
        %265 = vmatmul.f32.gmra.mxu0 %v239
        %v266 = vpop.f32.mrf.mxu0
        %v267 = vadd.f32 0.0, %v266
        %268 = vmatmul.f32.gmra.mxu0 %v241
        %v269 = vpop.f32.mrf.mxu0
        %v270 = vadd.f32 0.0, %v269
        %271 = vdwg.mxu0
        %v272 = vsel %vm234, %v218, 0
        %v274 = vsel %vm234, %v219, 0
        %v276 = vsel %vm234, %v220, 0
        %v278 = vsel %vm234, %v221, 0
        %280 = vmatpush.msra.mxu0 0.0
        %281 = vmatpush.msra.mxu0 0.0
        %282 = vmatpush.msra.mxu0 0.0
        %283 = vmatpush.msra.mxu0 0.0
        %284 = vmatpush.msra.mxu0 0.0
        %285 = vmatpush.msra.mxu0 0.0
        %286 = vmatpush.msra.mxu0 0.0
        %287 = vmatpush.msra.mxu0 0.0
        %288 = vmatpush.msra.mxu0 0.0
        %289 = vmatpush.msra.mxu0 0.0
        %290 = vmatpush.msra.mxu0 0.0
        %291 = vmatpush.msra.mxu0 0.0
        %292 = vmatpush.msra.mxu0 0.0
        %293 = vmatpush.msra.mxu0 0.0
        %294 = vmatpush.msra.mxu0 %v214
        %295 = vmatpush.msra.mxu0 %v213
        %296 = vmatmul.f32.gmra.mxu0 %v272
        %v297 = vpop.f32.mrf.mxu0
        %v298 = vadd.f32 %v261, %v297
        %299 = vmatmul.f32.gmra.mxu0 %v274
        %v300 = vpop.f32.mrf.mxu0
        %v301 = vadd.f32 %v264, %v300
        %302 = vmatmul.f32.gmra.mxu0 %v276
        %v303 = vpop.f32.mrf.mxu0
        %v304 = vadd.f32 %v267, %v303
        %305 = vmatmul.f32.gmra.mxu0 %v278
        %v306 = vpop.f32.mrf.mxu0
        %v307 = vadd.f32 %v270, %v306
        %308 = vdwg.mxu0
        %vm309 = vcmask 64512
        %310 = vst.msk [vmem:[%s210] sm:$0xff] %vm309, %v298
        %311 = vst.msk [vmem:[%s210 + $0x8] sm:$0xff] %vm309, %v301
        %312 = vst.msk [vmem:[%s210 + $0x10] sm:$0xff] %vm309, %v304
        %313 = vst.msk [vmem:[%s210 + $0x18] sm:$0xff] %vm309, %v307
        %318 = vrot.lane.b32.xlu0 %v298, 120
        %v319 = vpop.permute.xlu0 %318
        %320 = vrot.lane.b32.xlu0 %v301, 120
        %v321 = vpop.permute.xlu0 %320
        %322 = vrot.lane.b32.xlu0 %v304, 120
        %v323 = vpop.permute.xlu0 %322
        %324 = vrot.lane.b32.xlu0 %v307, 120
        %v325 = vpop.permute.xlu0 %324
        %s330 = scalar_lea.vmem %s210, 32 [#allocation7]
        %331 = vst.msk [vmem:[%s330] sm:$0xff] %vm309, %v319
        %332 = vst.msk [vmem:[%s330 + $0x8] sm:$0xff] %vm309, %v321
        %333 = vst.msk [vmem:[%s330 + $0x10] sm:$0xff] %vm309, %v323
        %334 = vst.msk [vmem:[%s330 + $0x18] sm:$0xff] %vm309, %v325
        %335 = vrot.lane.b32.xlu0 %v298, 112
        %v336 = vpop.permute.xlu0 %335
        %337 = vrot.lane.b32.xlu0 %v301, 112
        %v338 = vpop.permute.xlu0 %337
        %339 = vrot.lane.b32.xlu0 %v304, 112
        %v340 = vpop.permute.xlu0 %339
        %341 = vrot.lane.b32.xlu0 %v307, 112
        %v342 = vpop.permute.xlu0 %341
        %s347 = scalar_lea.vmem %s210, 64 [#allocation7]
        %348 = vst.msk [vmem:[%s347] sm:$0xff] %vm309, %v336
        %349 = vst.msk [vmem:[%s347 + $0x8] sm:$0xff] %vm309, %v338
        %350 = vst.msk [vmem:[%s347 + $0x10] sm:$0xff] %vm309, %v340
        %351 = vst.msk [vmem:[%s347 + $0x18] sm:$0xff] %vm309, %v342
        %352 = vrot.lane.b32.xlu0 %v298, 104
        %v353 = vpop.permute.xlu0 %352
        %354 = vrot.lane.b32.xlu0 %v301, 104
        %v355 = vpop.permute.xlu0 %354
        %356 = vrot.lane.b32.xlu0 %v304, 104
        %v357 = vpop.permute.xlu0 %356
        %358 = vrot.lane.b32.xlu0 %v307, 104
        %v359 = vpop.permute.xlu0 %358
        %s364 = scalar_lea.vmem %s210, 96 [#allocation7]
        %365 = vst.msk [vmem:[%s364] sm:$0xff] %vm309, %v353
        %366 = vst.msk [vmem:[%s364 + $0x8] sm:$0xff] %vm309, %v355
        %367 = vst.msk [vmem:[%s364 + $0x10] sm:$0xff] %vm309, %v357
        %368 = vst.msk [vmem:[%s364 + $0x18] sm:$0xff] %vm309, %v359
        %s369 = sand.u32 %s102, 1
        %s370 = scalar_lea.sflag [#allocation4], %s369
        %s371 = sand.u32 %s102, 1
        %s372 = smul.addr %s371, 128
        %s373 = scalar_lea.vmem [#allocation7], %s372
        // Predicated region
        $region37: #{tpu_custom_call.1} parent=27 // pred_check
          %p374 = pneg %p112
        $region38: #{tpu_custom_call.1} parent=27 // pred_check_branch
          %376 = sbr.rel (%p374) target = $region40
        $region39: #{tpu_custom_call.1} parent=27 // pred_region
          %s377 = smul.u32 4, %s26
          %379 = vsyncadd %s370, 0
          %s380 = sadd.s32 %s27, %s377
          %s381 = smul.addr %s25, 16
          %s382 = sadd.s32 %s380, %s381
          %s383 = smul.addr %s382, 8
          %s384 = scalar_lea.hbm %s2, %s383
          %s385 = sshll.u32 %s373, 4
          %s386 = int_to_ptr.vmem [resolvable:$true] %s385
          %s387 = sshll.u32 %s384, 4
          %s388 = int_to_ptr.hbm [resolvable:$true] %s387
          %393 = dma.vmem_to_hbm [thread:$0]  %s386, 2048, %s388, %s370, 128, 128, 8
        $region40: #{tpu_custom_call.1} parent=27 // pred_fallthru
          _
      $region28: #{tpu_custom_call.1} parent=5 // pred_fallthru
        _
      %p394 = scmp.le.s32.totalorder 2, %s15
      // Predicated region
      $region41: #{tpu_custom_call.1} parent=5 // pred_check
        %p395 = pneg %p394
      $region42: #{tpu_custom_call.1} parent=5 // pred_check_branch
        %397 = sbr.rel (%p395) target = $region44
      $region43: #{tpu_custom_call.1} parent=5 // pred_region
        %s398 = ssub.s32 %s15, 2
        // Predicated region
        $region45: #{tpu_custom_call.1} parent=43 // pred_check
          %p399 = pneg %p118
        $region46: #{tpu_custom_call.1} parent=43 // pred_check_branch
          %401 = sbr.rel (%p399) target = $region48
        $region47: #{tpu_custom_call.1} parent=43 // pred_region
          %s402 = sand.u32 %s103, 1
          %s403 = scalar_lea.sflag [#allocation4], %s402
          %s404 = sand.u32 %s103, 1
          %s405 = smul.addr %s404, 128
          %s406 = scalar_lea.vmem [#allocation7], %s405
          %408 = dma.done %s403, 2048
        $region48: #{tpu_custom_call.1} parent=43 // pred_fallthru
          _
      $region44: #{tpu_custom_call.1} parent=5 // pred_fallthru
        _
    $region6: #{tpu_custom_call.1} parent=1 // loop_footer
      %s19 = sadd.s32 1, %s15
    $region7: #{tpu_custom_call.1} parent=1 // loop_footer_branch
      %14 = sbr.rel target = $region3
    $region8: #{tpu_custom_call.1} parent=1 // loop_exit
      _
    %409 = vsyncpa [#allocation3], 1
    %s410 = scalar_lea.sflag [#allocation3], 1
    %411 = vsyncpa %s410, 1
    %412 = vsyncpa [#allocation6], 1
    %s413 = scalar_lea.sflag [#allocation6], 1
    %414 = vsyncpa %s413, 1
    %415 = vsyncpa [#allocation4], 1
    %s416 = scalar_lea.sflag [#allocation4], 1
    %417 = vsyncpa %s416, 1

</llo_original>
